<compile_context>
chip_gen: v7x
topology: tpu7x:2x2x1
jax: 0.10.0
libtpu: 0.0.40
codegen_flags: <defaults>
</compile_context>

<pallas_src>
import jax
import jax.numpy as jnp
from jax import lax
from jax.experimental import pallas as pl
from jax.experimental.pallas import tpu as pltpu

EPS = 1e-8
_VMEM_LIMIT_BYTES = 32 * 1024 * 1024  # safe on v5e/v6e/v7x scoped-VMEM budgets


def _stats_kernel(x_ref, sum_ref, gram_ref):
    """Accumulate column sums and the raw Gram matrix x^T x over the N grid."""

    @pl.when(pl.program_id(0) == 0)
    def _():
        sum_ref[...] = jnp.zeros_like(sum_ref)
        gram_ref[...] = jnp.zeros_like(gram_ref)

    x = x_ref[...].astype(jnp.float32)                      # (TILE_N, D)
    sum_ref[...] += jnp.sum(x, axis=0, keepdims=True)       # (1, D)
    # x^T x without an explicit .T: contract over the batch (sublane) axis so
    # the MXU consumes the operand in its natural layout (no XLU transpose).
    gram_ref[...] += lax.dot_general(
        x, x,
        dimension_numbers=(((0,), (0,)), ((), ())),
        preferred_element_type=jnp.float32,
    )


def _whiten_kernel(x_ref, w_ref, bias_ref, o_ref):
    """o = x @ W - bias, with bias = mean @ W fusing the centering step."""
    y = jnp.dot(
        x_ref[...].astype(jnp.float32), w_ref[...],
        preferred_element_type=jnp.float32,
    )
    o_ref[...] = (y - bias_ref[...]).astype(o_ref.dtype)


def _choose_tile_n(n: int, d: int) -> int:
    """Largest batch-tile (multiple of 8, dividing N) with a ~2 MiB x-tile."""
    target = (2 * 1024 * 1024) // max(4 * d, 1)
    t = min(n, max(8, target))
    t = max(8, (t // 8) * 8)
    if t >= n:
        return n
    while n % t != 0 and t > 8:
        t -= 8
    return t if n % t == 0 else n


def whitening1d_cholesky(x: jax.Array, eps: float = EPS, tile_n=None) -> jax.Array:
    """Port of Whitening1dCholesky.forward for x of shape (N, D), float32."""
    x = x.astype(jnp.float32)
    n, d = x.shape
    if tile_n is None:
        tile_n = _choose_tile_n(n, d)
    assert n % tile_n == 0, "tile_n must divide the batch dimension"
    grid = (n // tile_n,)

    # --- Pallas kernel 1: column sums + Gram matrix ---------------------------
    stats_cost = pl.CostEstimate(
        flops=2 * n * d * d + n * d,
        transcendentals=0,
        bytes_accessed=(n * d + d * d + d) * 4,
    )
    col_sum, gram = pl.pallas_call(
        _stats_kernel,
        out_shape=(
            jax.ShapeDtypeStruct((1, d), jnp.float32),
            jax.ShapeDtypeStruct((d, d), jnp.float32),
        ),
        grid_spec=pltpu.PrefetchScalarGridSpec(
            num_scalar_prefetch=0,
            grid=grid,
            in_specs=[pl.BlockSpec((tile_n, d), lambda i: (i, 0))],
            out_specs=(
                pl.BlockSpec((1, d), lambda i: (0, 0)),
                pl.BlockSpec((d, d), lambda i: (0, 0)),
            ),
        ),
        compiler_params=pltpu.CompilerParams(
            dimension_semantics=("arbitrary",),
            vmem_limit_bytes=_VMEM_LIMIT_BYTES,
        ),
        cost_estimate=stats_cost,
    )(x)

    # --- plain-JAX glue on the tiny D x D problem ------------------------------
    mean = col_sum / n                                        # (1, D)
    cov = (gram - n * (mean.T @ mean)) / (n - 1)              # (D, D)
    a = (1.0 - eps) * cov + eps * jnp.eye(d, dtype=jnp.float32)
    chol = jnp.linalg.cholesky(a)                             # lower-triangular L
    inv_sqrt = jax.scipy.linalg.solve_triangular(             # L^{-1}
        chol, jnp.eye(d, dtype=jnp.float32), lower=True
    )
    bias = mean @ inv_sqrt                                    # (1, D)

    # --- Pallas kernel 2: fused centering + whitening matmul -------------------
    whiten_cost = pl.CostEstimate(
        flops=2 * n * d * d,
        transcendentals=0,
        bytes_accessed=(2 * n * d + d * d + d) * 4,
    )
    out = pl.pallas_call(
        _whiten_kernel,
        out_shape=jax.ShapeDtypeStruct((n, d), jnp.float32),
        grid_spec=pltpu.PrefetchScalarGridSpec(
            num_scalar_prefetch=0,
            grid=grid,
            in_specs=[
                pl.BlockSpec((tile_n, d), lambda i: (i, 0)),
                pl.BlockSpec((d, d), lambda i: (0, 0)),
                pl.BlockSpec((1, d), lambda i: (0, 0)),
            ],
            out_specs=pl.BlockSpec((tile_n, d), lambda i: (i, 0)),
        ),
        compiler_params=pltpu.CompilerParams(
            dimension_semantics=("parallel",),  # megacore sharding on v7x
            vmem_limit_bytes=_VMEM_LIMIT_BYTES,
        ),
        cost_estimate=whiten_cost,
    )(x, inv_sqrt.astype(jnp.float32), bias.astype(jnp.float32))
    return out


def _reference(x: jax.Array, eps: float = EPS) -> jax.Array:
    """Pure-JAX transcription of the PyTorch forward, for verification."""
    x = x.astype(jnp.float32)
    xn = x - jnp.mean(x, axis=0, keepdims=True)
    f_cov = xn.T @ xn / (x.shape[0] - 1)
    a = (1.0 - eps) * f_cov + eps * jnp.eye(f_cov.shape[0], dtype=jnp.float32)
    chol = jnp.linalg.cholesky(a)
    inv_sqrt = jnp.linalg.inv(chol)
    return xn @ inv_sqrt


if __name__ == "__main__":
    # Small shapes consistent with the module: batch N=256, hidden D=32.
    key = jax.random.PRNGKey(0)
    x = jax.random.normal(key, (256, 32), dtype=jnp.float32) * 0.5 + 1.0

    ref = jax.block_until_ready(_reference(x))

    # Auto-chosen tile (single tile at this tiny size).
    out_auto = jax.block_until_ready(whitening1d_cholesky(x))
    # Forced small tile to exercise the multi-step accumulation/pipeline path.
    out_tiled = jax.block_until_ready(whitening1d_cholesky(x, tile_n=64))

    assert out_auto.shape == (256, 32) and out_auto.dtype == jnp.float32
    assert jnp.allclose(out_auto, ref, atol=1e-3, rtol=1e-3)
    assert jnp.allclose(out_tiled, ref, atol=1e-3, rtol=1e-3)

    print("KERNEL_OK")
</pallas_src>

<mosaic_0001>
module attributes {stable_mosaic.version = 11 : i64} {
  func.func @_stats_kernel(%arg0: i32, %arg1: memref<256x32xf32, #tpu.memory_space<vmem>>, %arg2: memref<1x32xf32, #tpu.memory_space<vmem>>, %arg3: memref<32x32xf32, #tpu.memory_space<vmem>>) attributes {dimension_semantics = [#tpu.dimension_semantics<arbitrary>], iteration_bounds = array<i64: 1>, scalar_prefetch = 0 : i64, scratch_operands = 0 : i64, tpu.core_type = #tpu.core_type<tc>, window_params = [{transform_indices = @transform_0, window_bounds = array<i64: 256, 32>}, {pipeline_mode = #tpu.pipeline_mode<synchronous>, transform_indices = @transform_1, window_bounds = array<i64: 1, 32>}, {pipeline_mode = #tpu.pipeline_mode<synchronous>, transform_indices = @transform_2, window_bounds = array<i64: 32, 32>}]} {
    %c0_i32 = arith.constant 0 : i32
    %0 = arith.cmpi eq, %arg0, %c0_i32 : i32
    %1 = arith.extui %0 : i1 to i32
    %c0_i32_0 = arith.constant 0 : i32
    %2 = arith.cmpi ne, %1, %c0_i32_0 : i32
    scf.if %2 {
      %cst_11 = arith.constant 0.000000e+00 : f32
      %13 = vector.broadcast %cst_11 : f32 to vector<1x32xf32>
      %c0_12 = arith.constant 0 : index
      %c0_13 = arith.constant 0 : index
      %14 = vector.load %arg2[%c0_12, %c0_13] : memref<1x32xf32, #tpu.memory_space<vmem>>, vector<1x32xf32>
      tpu.vector_store %arg2[%c0_12, %c0_13], %13 {strides = array<i32>} : memref<1x32xf32, #tpu.memory_space<vmem>>, vector<1x32xf32>,
      %cst_14 = arith.constant 0.000000e+00 : f32
      %15 = vector.broadcast %cst_14 : f32 to vector<32x32xf32>
      %c0_15 = arith.constant 0 : index
      %c0_16 = arith.constant 0 : index
      %16 = vector.load %arg3[%c0_15, %c0_16] : memref<32x32xf32, #tpu.memory_space<vmem>>, vector<32x32xf32>
      tpu.vector_store %arg3[%c0_15, %c0_16], %15 {strides = array<i32>} : memref<32x32xf32, #tpu.memory_space<vmem>>, vector<32x32xf32>,
    } else {
    }
    %c0 = arith.constant 0 : index
    %c0_1 = arith.constant 0 : index
    %3 = vector.load %arg1[%c0, %c0_1] : memref<256x32xf32, #tpu.memory_space<vmem>>, vector<256x32xf32>
    %c0_2 = arith.constant 0 : index
    %c0_3 = arith.constant 0 : index
    %4 = vector.load %arg2[%c0_2, %c0_3] : memref<1x32xf32, #tpu.memory_space<vmem>>, vector<1x32xf32>
    %cst = arith.constant dense<0.000000e+00> : vector<32xf32>
    %5 = vector.multi_reduction <add>, %3, %cst [0] : vector<256x32xf32> to vector<32xf32>
    %6 = vector.shape_cast %5 : vector<32xf32> to vector<1x32xf32>
    %7 = arith.addf %4, %6 : vector<1x32xf32>
    %c0_4 = arith.constant 0 : index
    %c0_5 = arith.constant 0 : index
    %8 = vector.load %arg2[%c0_4, %c0_5] : memref<1x32xf32, #tpu.memory_space<vmem>>, vector<1x32xf32>
    tpu.vector_store %arg2[%c0_4, %c0_5], %7 {strides = array<i32>} : memref<1x32xf32, #tpu.memory_space<vmem>>, vector<1x32xf32>,
    %c0_6 = arith.constant 0 : index
    %c0_7 = arith.constant 0 : index
    %9 = vector.load %arg3[%c0_6, %c0_7] : memref<32x32xf32, #tpu.memory_space<vmem>>, vector<32x32xf32>
    %cst_8 = arith.constant dense<0.000000e+00> : vector<32x32xf32>
    %10 = tpu.matmul %3, %3, %cst_8 {dimension_numbers = #tpu.dot_dimension_numbers<[0], [0], [1], [1], [0, 1, 1, 1], [], []>} : vector<256x32xf32>, vector<256x32xf32>, vector<32x32xf32> -> vector<32x32xf32>
    %11 = arith.addf %9, %10 : vector<32x32xf32>
    %c0_9 = arith.constant 0 : index
    %c0_10 = arith.constant 0 : index
    %12 = vector.load %arg3[%c0_9, %c0_10] : memref<32x32xf32, #tpu.memory_space<vmem>>, vector<32x32xf32>
    tpu.vector_store %arg3[%c0_9, %c0_10], %11 {strides = array<i32>} : memref<32x32xf32, #tpu.memory_space<vmem>>, vector<32x32xf32>,
    return
  }
  func.func @transform_0(%arg0: i32) -> (i32, i32) {
    %c0_i32 = arith.constant 0 : i32
    %c0_i32_0 = arith.constant 0 : i32
    return %arg0, %c0_i32 : i32, i32
  }
  func.func @transform_1(%arg0: i32) -> (i32, i32) {
    %c0_i32 = arith.constant 0 : i32
    %c0_i32_0 = arith.constant 0 : i32
    %c0_i32_1 = arith.constant 0 : i32
    return %c0_i32, %c0_i32_0 : i32, i32
  }
  func.func @transform_2(%arg0: i32) -> (i32, i32) {
    %c0_i32 = arith.constant 0 : i32
    %c0_i32_0 = arith.constant 0 : i32
    %c0_i32_1 = arith.constant 0 : i32
    return %c0_i32, %c0_i32_0 : i32, i32
  }
}

</mosaic_0001>

<llo_original>
// kernel: tpu_custom_call.1
$region0: #{tpu_custom_call.1}
  #allocation0 [shape = 'u32[]', space=smem, size = 0x4, offset = 0x4, fixed_abs, tag = 'smem constant byte address 0x4 - core index']
  #allocation1 [shape = 'u32[144,128]{1,0:T(1,128)}', space=vmem, size = 0x12000, scoped, tag = 'internal scratch']
  %s0 = inlined_call_operand.vmem [shape: f32[256,32], index: 0, kind: input, shape index: {}]
  %s1 = inlined_call_operand.hbm [shape: f32[1,32], index: 1, kind: output, shape index: {0}]
  %s2 = inlined_call_operand.hbm [shape: f32[32,32], index: 2, kind: output, shape index: {1}]
  %3 = xla_tuple %s1, %s2
  %s4 = sld [smem:[#allocation0]]
  $region26: #{tpu_custom_call.1} parent=0
    _
  %s6 = ssub.s32 1, %s4
  %s7 = scalar_select 0, %s6, %s4
  $region1: #{tpu_custom_call.1} parent=0
    #allocation2 [shape = 'u8[512]{0}', space=vmem, size = 0x400, scoped, tag = 'output window, operand 0, single buffered']
    #allocation3 [shape = 's32[1]{0}', space=sflag, size = 0x4, scoped, tag = 'scoped memory for tpu_custom_call.1']
    #allocation4 [shape = 'u8[16384]{0}', space=vmem, size = 0x4000, scoped, tag = 'output window, operand 1, single buffered']
    #allocation5 [shape = 's32[1]{0}', space=sflag, size = 0x4, scoped, tag = 'scoped memory for tpu_custom_call.1']
    %8 = vsyncpa [#allocation3], 0
    %9 = vsyncpa [#allocation5], 0
    // Predicated region
    $region2: #{tpu_custom_call.1} parent=1 // pred_check
      _
    $region3: #{tpu_custom_call.1} parent=1 // pred_check_branch
      %11 = sbr.rel (0) target = $region5
    $region4: #{tpu_custom_call.1} parent=1 // pred_region
      _
    $region5: #{tpu_custom_call.1} parent=1 // pred_fallthru
      _
    %p12 = scmp.eq.s32.totalorder 0, 0
    // Predicated region
    $region6: #{tpu_custom_call.1} parent=1 // pred_check
      %p13 = pneg %p12
    $region7: #{tpu_custom_call.1} parent=1 // pred_check_branch
      %15 = sbr.rel (%p13) target = $region9
    $region8: #{tpu_custom_call.1} parent=1 // pred_region
      %vm16 = vcmask 253952
      %17 = vst.msk [vmem:[#allocation2] sm:$0x1] %vm16, 0.0
      %vm18 = vcmask 261120
      %19 = vst.msk [vmem:[#allocation4] sm:$0xff] %vm18, 0.0
      %20 = vst.msk [vmem:[#allocation4 + $0x8] sm:$0xff] %vm18, 0.0
      %21 = vst.msk [vmem:[#allocation4 + $0x10] sm:$0xff] %vm18, 0.0
      %22 = vst.msk [vmem:[#allocation4 + $0x18] sm:$0xff] %vm18, 0.0
    $region9: #{tpu_custom_call.1} parent=1 // pred_fallthru
      _
    %v23 = vld [vmem:[%s0] sm:$0xff]
    %v24 = vld [vmem:[%s0 + $0x8] sm:$0xff]
    %v25 = vld [vmem:[%s0 + $0x10] sm:$0xff]
    %v26 = vld [vmem:[%s0 + $0x18] sm:$0xff]
    %v27 = vld [vmem:[%s0 + $0x20] sm:$0xff]
    %v28 = vld [vmem:[%s0 + $0x28] sm:$0xff]
    %v29 = vld [vmem:[%s0 + $0x30] sm:$0xff]
    %v30 = vld [vmem:[%s0 + $0x38] sm:$0xff]
    %v31 = vld [vmem:[%s0 + $0x40] sm:$0xff]
    %v32 = vld [vmem:[%s0 + $0x48] sm:$0xff]
    %v33 = vld [vmem:[%s0 + $0x50] sm:$0xff]
    %v34 = vld [vmem:[%s0 + $0x58] sm:$0xff]
    %v35 = vld [vmem:[%s0 + $0x60] sm:$0xff]
    %v36 = vld [vmem:[%s0 + $0x68] sm:$0xff]
    %v37 = vld [vmem:[%s0 + $0x70] sm:$0xff]
    %v38 = vld [vmem:[%s0 + $0x78] sm:$0xff]
    %v39 = vld [vmem:[%s0 + $0x80] sm:$0xff]
    %v40 = vld [vmem:[%s0 + $0x88] sm:$0xff]
    %v41 = vld [vmem:[%s0 + $0x90] sm:$0xff]
    %v42 = vld [vmem:[%s0 + $0x98] sm:$0xff]
    %v43 = vld [vmem:[%s0 + $0xa0] sm:$0xff]
    %v44 = vld [vmem:[%s0 + $0xa8] sm:$0xff]
    %v45 = vld [vmem:[%s0 + $0xb0] sm:$0xff]
    %v46 = vld [vmem:[%s0 + $0xb8] sm:$0xff]
    %v47 = vld [vmem:[%s0 + $0xc0] sm:$0xff]
    %v48 = vld [vmem:[%s0 + $0xc8] sm:$0xff]
    %v49 = vld [vmem:[%s0 + $0xd0] sm:$0xff]
    %v50 = vld [vmem:[%s0 + $0xd8] sm:$0xff]
    %v51 = vld [vmem:[%s0 + $0xe0] sm:$0xff]
    %v52 = vld [vmem:[%s0 + $0xe8] sm:$0xff]
    %v53 = vld [vmem:[%s0 + $0xf0] sm:$0xff]
    %v54 = vld [vmem:[%s0 + $0xf8] sm:$0xff]
    %v55 = vld [vmem:[#allocation2] sm:$0x1]
    %vm56 = vcmask 261120
    %v57 = vsel %vm56, %v23, 0.0
    %v58 = vsel %vm56, %v24, 0.0
    %v59 = vadd.f32 %v57, %v58
    %v60 = vsel %vm56, %v25, 0.0
    %v61 = vadd.f32 %v59, %v60
    %v62 = vsel %vm56, %v26, 0.0
    %v63 = vadd.f32 %v61, %v62
    %v64 = vsel %vm56, %v27, 0.0
    %v65 = vadd.f32 %v63, %v64
    %v66 = vsel %vm56, %v28, 0.0
    %v67 = vadd.f32 %v65, %v66
    %v68 = vsel %vm56, %v29, 0.0
    %v69 = vadd.f32 %v67, %v68
    %v70 = vsel %vm56, %v30, 0.0
    %v71 = vadd.f32 %v69, %v70
    %v72 = vsel %vm56, %v31, 0.0
    %v73 = vadd.f32 %v71, %v72
    %v74 = vsel %vm56, %v32, 0.0
    %v75 = vadd.f32 %v73, %v74
    %v76 = vsel %vm56, %v33, 0.0
    %v77 = vadd.f32 %v75, %v76
    %v78 = vsel %vm56, %v34, 0.0
    %v79 = vadd.f32 %v77, %v78
    %v80 = vsel %vm56, %v35, 0.0
    %v81 = vadd.f32 %v79, %v80
    %v82 = vsel %vm56, %v36, 0.0
    %v83 = vadd.f32 %v81, %v82
    %v84 = vsel %vm56, %v37, 0.0
    %v85 = vadd.f32 %v83, %v84
    %v86 = vsel %vm56, %v38, 0.0
    %v87 = vadd.f32 %v85, %v86
    %v88 = vsel %vm56, %v39, 0.0
    %v89 = vadd.f32 %v87, %v88
    %v90 = vsel %vm56, %v40, 0.0
    %v91 = vadd.f32 %v89, %v90
    %v92 = vsel %vm56, %v41, 0.0
    %v93 = vadd.f32 %v91, %v92
    %v94 = vsel %vm56, %v42, 0.0
    %v95 = vadd.f32 %v93, %v94
    %v96 = vsel %vm56, %v43, 0.0
    %v97 = vadd.f32 %v95, %v96
    %v98 = vsel %vm56, %v44, 0.0
    %v99 = vadd.f32 %v97, %v98
    %v100 = vsel %vm56, %v45, 0.0
    %v101 = vadd.f32 %v99, %v100
    %v102 = vsel %vm56, %v46, 0.0
    %v103 = vadd.f32 %v101, %v102
    %v104 = vsel %vm56, %v47, 0.0
    %v105 = vadd.f32 %v103, %v104
    %v106 = vsel %vm56, %v48, 0.0
    %v107 = vadd.f32 %v105, %v106
    %v108 = vsel %vm56, %v49, 0.0
    %v109 = vadd.f32 %v107, %v108
    %v110 = vsel %vm56, %v50, 0.0
    %v111 = vadd.f32 %v109, %v110
    %v112 = vsel %vm56, %v51, 0.0
    %v113 = vadd.f32 %v111, %v112
    %v114 = vsel %vm56, %v52, 0.0
    %v115 = vadd.f32 %v113, %v114
    %v116 = vsel %vm56, %v53, 0.0
    %v117 = vadd.f32 %v115, %v116
    %v118 = vsel %vm56, %v54, 0.0
    %v119 = vadd.f32 %v117, %v118
    %v120 = vrot.slane %v119, 4
    %v121 = vadd.f32 %v119, %v120
    %v122 = vrot.slane %v121, 2
    %v123 = vadd.f32 %v121, %v122
    %v124 = vrot.slane %v123, 1
    %v125 = vadd.f32 %v123, %v124
    %v126 = vadd.f32 %v55, %v125
    %vm127 = vcmask 253952
    %128 = vst.msk [vmem:[#allocation2] sm:$0x1] %vm127, %v126
    %v129 = vld [vmem:[#allocation4] sm:$0xff]
    %v130 = vld [vmem:[#allocation4 + $0x8] sm:$0xff]
    %v131 = vld [vmem:[#allocation4 + $0x10] sm:$0xff]
    %v132 = vld [vmem:[#allocation4 + $0x18] sm:$0xff]
    %133 = vxpose.xlu0.b32.start [1/16] %v23, 128
    %134 = vxpose.xlu0.b32.cont [2/16] %v24, 128
    %135 = vxpose.xlu0.b32.cont [3/16] %v25, 128
    %136 = vxpose.xlu0.b32.cont [4/16] %v26, 128
    %137 = vxpose.xlu0.b32.cont [5/16] %v27, 128
    %138 = vxpose.xlu0.b32.cont [6/16] %v28, 128
    %139 = vxpose.xlu0.b32.cont [7/16] %v29, 128
    %140 = vxpose.xlu0.b32.cont [8/16] %v30, 128
    %141 = vxpose.xlu0.b32.cont [9/16] %v31, 128
    %142 = vxpose.xlu0.b32.cont [10/16] %v32, 128
    %143 = vxpose.xlu0.b32.cont [11/16] %v33, 128
    %144 = vxpose.xlu0.b32.cont [12/16] %v34, 128
    %145 = vxpose.xlu0.b32.cont [13/16] %v35, 128
    %146 = vxpose.xlu0.b32.cont [14/16] %v36, 128
    %147 = vxpose.xlu0.b32.cont [15/16] %v37, 128
    %148 = vxpose.xlu0.b32.end [16/16] %v38, 128
    %v149 = vpop.trf.xlu0
    %v150 = vpop.trf.xlu0
    %v151 = vpop.trf.xlu0
    %v152 = vpop.trf.xlu0
    %v153 = vpop.trf.xlu0
    %v154 = vpop.trf.xlu0
    %v155 = vpop.trf.xlu0
    %v156 = vpop.trf.xlu0
    %v157 = vpop.trf.xlu0
    %v158 = vpop.trf.xlu0
    %v159 = vpop.trf.xlu0
    %v160 = vpop.trf.xlu0
    %v161 = vpop.trf.xlu0
    %v162 = vpop.trf.xlu0
    %v163 = vpop.trf.xlu0
    %v164 = vpop.trf.xlu0
    %165 = vxpose.xlu0.b32.start [1/16] %v39, 128
    %166 = vxpose.xlu0.b32.cont [2/16] %v40, 128
    %167 = vxpose.xlu0.b32.cont [3/16] %v41, 128
    %168 = vxpose.xlu0.b32.cont [4/16] %v42, 128
    %169 = vxpose.xlu0.b32.cont [5/16] %v43, 128
    %170 = vxpose.xlu0.b32.cont [6/16] %v44, 128
    %171 = vxpose.xlu0.b32.cont [7/16] %v45, 128
    %172 = vxpose.xlu0.b32.cont [8/16] %v46, 128
    %173 = vxpose.xlu0.b32.cont [9/16] %v47, 128
    %174 = vxpose.xlu0.b32.cont [10/16] %v48, 128
    %175 = vxpose.xlu0.b32.cont [11/16] %v49, 128
    %176 = vxpose.xlu0.b32.cont [12/16] %v50, 128
    %177 = vxpose.xlu0.b32.cont [13/16] %v51, 128
    %178 = vxpose.xlu0.b32.cont [14/16] %v52, 128
    %179 = vxpose.xlu0.b32.cont [15/16] %v53, 128
    %180 = vxpose.xlu0.b32.end [16/16] %v54, 128
    %v181 = vpop.trf.xlu0
    %v182 = vpop.trf.xlu0
    %v183 = vpop.trf.xlu0
    %v184 = vpop.trf.xlu0
    %v185 = vpop.trf.xlu0
    %v186 = vpop.trf.xlu0
    %v187 = vpop.trf.xlu0
    %v188 = vpop.trf.xlu0
    %v189 = vpop.trf.xlu0
    %v190 = vpop.trf.xlu0
    %v191 = vpop.trf.xlu0
    %v192 = vpop.trf.xlu0
    %v193 = vpop.trf.xlu0
    %v194 = vpop.trf.xlu0
    %v195 = vpop.trf.xlu0
    %v196 = vpop.trf.xlu0
    %197 = vmatprep.subr.mxu0 0.0
    %198 = vmatpush1.msra.mxu0 %v23
    %199 = vmatprep.subr.mxu0 0.0
    %200 = vmatpush1.msra.mxu0 %v24
    %201 = vmatprep.subr.mxu0 0.0
    %202 = vmatpush1.msra.mxu0 %v25
    %203 = vmatprep.subr.mxu0 0.0
    %204 = vmatpush1.msra.mxu0 %v26
    %205 = vmatprep.subr.mxu0 0.0
    %206 = vmatpush1.msra.mxu0 %v27
    %207 = vmatprep.subr.mxu0 0.0
    %208 = vmatpush1.msra.mxu0 %v28
    %209 = vmatprep.subr.mxu0 0.0
    %210 = vmatpush1.msra.mxu0 %v29
    %211 = vmatprep.subr.mxu0 0.0
    %212 = vmatpush1.msra.mxu0 %v30
    %213 = vmatprep.subr.mxu0 0.0
    %214 = vmatpush1.msra.mxu0 %v31
    %215 = vmatprep.subr.mxu0 0.0
    %216 = vmatpush1.msra.mxu0 %v32
    %217 = vmatprep.subr.mxu0 0.0
    %218 = vmatpush1.msra.mxu0 %v33
    %219 = vmatprep.subr.mxu0 0.0
    %220 = vmatpush1.msra.mxu0 %v34
    %221 = vmatprep.subr.mxu0 0.0
    %222 = vmatpush1.msra.mxu0 %v35
    %223 = vmatprep.subr.mxu0 0.0
    %224 = vmatpush1.msra.mxu0 %v36
    %225 = vmatprep.subr.mxu0 0.0
    %226 = vmatpush1.msra.mxu0 %v37
    %227 = vmatprep.subr.mxu0 0.0
    %228 = vmatpush1.msra.mxu0 %v38
    %229 = vmatprep.subr.mxu0 0.0
    %230 = vmatpush1.msra.mxu0 %v39
    %231 = vmatprep.subr.mxu0 0.0
    %232 = vmatpush1.msra.mxu0 %v40
    %233 = vmatprep.subr.mxu0 0.0
    %234 = vmatpush1.msra.mxu0 %v41
    %235 = vmatprep.subr.mxu0 0.0
    %236 = vmatpush1.msra.mxu0 %v42
    %237 = vmatprep.subr.mxu0 0.0
    %238 = vmatpush1.msra.mxu0 %v43
    %239 = vmatprep.subr.mxu0 0.0
    %240 = vmatpush1.msra.mxu0 %v44
    %241 = vmatprep.subr.mxu0 0.0
    %242 = vmatpush1.msra.mxu0 %v45
    %243 = vmatprep.subr.mxu0 0.0
    %244 = vmatpush1.msra.mxu0 %v46
    %245 = vmatprep.subr.mxu0 0.0
    %246 = vmatpush1.msra.mxu0 %v47
    %247 = vmatprep.subr.mxu0 0.0
    %248 = vmatpush1.msra.mxu0 %v48
    %249 = vmatprep.subr.mxu0 0.0
    %250 = vmatpush1.msra.mxu0 %v49
    %251 = vmatprep.subr.mxu0 0.0
    %252 = vmatpush1.msra.mxu0 %v50
    %253 = vmatprep.subr.mxu0 0.0
    %254 = vmatpush1.msra.mxu0 %v51
    %255 = vmatprep.subr.mxu0 0.0
    %256 = vmatpush1.msra.mxu0 %v52
    %257 = vmatprep.subr.mxu0 0.0
    %258 = vmatpush1.msra.mxu0 %v53
    %259 = vmatprep.subr.mxu0 0.0
    %260 = vmatpush1.msra.mxu0 %v54
    %261 = vmatprep.mubr.f32.mxu0 %v181
    %262 = vmatmul.mubr.f32.gmra.mrb[0].mxu0 %v149
    %v263 = vpop.f32.mrb[0].mxu0
    %v264 = vadd.f32 0.0, %v263
    %v265 = vpop.f32.mrb[0].mxu0
    %266 = vmatprep.mubr.f32.mxu0 %v182
    %267 = vmatmul.mubr.f32.gmra.mrb[0].mxu0 %v150
    %v268 = vpop.f32.mrb[0].mxu0
    %v269 = vadd.f32 0.0, %v268
    %v270 = vpop.f32.mrb[0].mxu0
    %271 = vmatprep.mubr.f32.mxu0 %v183
    %272 = vmatmul.mubr.f32.gmra.mrb[0].mxu0 %v151
    %v273 = vpop.f32.mrb[0].mxu0
    %v274 = vadd.f32 0.0, %v273
    %v275 = vpop.f32.mrb[0].mxu0
    %276 = vmatprep.mubr.f32.mxu0 %v184
    %277 = vmatmul.mubr.f32.gmra.mrb[0].mxu0 %v152
    %v278 = vpop.f32.mrb[0].mxu0
    %v279 = vadd.f32 0.0, %v278
    %v280 = vpop.f32.mrb[0].mxu0
    %281 = vdwg.mxu0
    %v282 = vadd.f32 %v129, %v264
    %v283 = vadd.f32 %v130, %v269
    %v284 = vadd.f32 %v131, %v274
    %v285 = vadd.f32 %v132, %v279
    %286 = vst.msk [vmem:[#allocation4] sm:$0xff] %vm56, %v282
    %287 = vst.msk [vmem:[#allocation4 + $0x8] sm:$0xff] %vm56, %v283
    %288 = vst.msk [vmem:[#allocation4 + $0x10] sm:$0xff] %vm56, %v284
    %289 = vst.msk [vmem:[#allocation4 + $0x18] sm:$0xff] %vm56, %v285
    // Predicated region
    $region10: #{tpu_custom_call.1} parent=1 // pred_check
      _
    $region11: #{tpu_custom_call.1} parent=1 // pred_check_branch
      %291 = sbr.rel (0) target = $region13
    $region12: #{tpu_custom_call.1} parent=1 // pred_region
      %s293 = ssub.s32 16, 16
      %294 = vsyncadd [#allocation3], %s293
      %s296 = sshll.u32 [#allocation2], 4
      %s297 = int_to_ptr.vmem [resolvable:$true] %s296
      %299 = dma.vmem_to_hbm [thread:$0]  %s297, 16, %s1, [#allocation3]
    $region13: #{tpu_custom_call.1} parent=1 // pred_fallthru
      _
    // Predicated region
    $region14: #{tpu_custom_call.1} parent=1 // pred_check
      _
    $region15: #{tpu_custom_call.1} parent=1 // pred_check_branch
      %301 = sbr.rel (0) target = $region17
    $region16: #{tpu_custom_call.1} parent=1 // pred_region
      %s303 = ssub.s32 512, 512
      %304 = vsyncadd [#allocation5], %s303
      %s305 = sshll.u32 [#allocation4], 4
      %s306 = int_to_ptr.vmem [resolvable:$true] %s305
      %311 = dma.vmem_to_hbm [thread:$0]  %s306, 512, %s2, [#allocation5], 128, 128, 8
    $region17: #{tpu_custom_call.1} parent=1 // pred_fallthru
      _
    // Predicated region
    $region18: #{tpu_custom_call.1} parent=1 // pred_check
      _
    $region19: #{tpu_custom_call.1} parent=1 // pred_check_branch
      %313 = sbr.rel (0) target = $region21
    $region20: #{tpu_custom_call.1} parent=1 // pred_region
      %314 = dma.done [#allocation3], 16
    $region21: #{tpu_custom_call.1} parent=1 // pred_fallthru
      _
    // Predicated region
    $region22: #{tpu_custom_call.1} parent=1 // pred_check
      _
    $region23: #{tpu_custom_call.1} parent=1 // pred_check_branch
      %316 = sbr.rel (0) target = $region25
    $region24: #{tpu_custom_call.1} parent=1 // pred_region
      %317 = dma.done [#allocation5], 512
    $region25: #{tpu_custom_call.1} parent=1 // pred_fallthru
      _
    %318 = vsyncpa [#allocation3], 1
    %319 = vsyncpa [#allocation5], 1

</llo_original>
